<compile_context>
chip_gen: v6e
topology: v6e:2x2x1
jax: 0.10.0
libtpu: 0.0.40
codegen_flags: <defaults>
</compile_context>

<pallas_src>
import functools

import jax
import jax.numpy as jnp
from jax.experimental import pallas as pl
from jax.experimental.pallas import tpu as pltpu


def _cholesky_head_kernel(x_ref, w1_ref, b1_ref, w2t_ref, b2t_ref, out_ref):
    x = x_ref[...]                                           # (TM, D) nodes-on-sublanes

    # h = x @ W1 in natural orientation (no relayout of the large x tile).
    h = jnp.dot(x, w1_ref[...], preferred_element_type=jnp.float32)   # (TM, d_hid) f32
    h = h + b1_ref[...]                                      # (1, d_hid) broadcast
    h = h * jax.nn.sigmoid(h)                                 # SiLU

    # p^T = W2^T @ h^T -> (6, TM), nodes on lanes.  Trans-rhs dot: only the small
    # (TM, d_hid) h tensor is relaid out, never the x tile.
    pt = jax.lax.dot_general(
        w2t_ref[...], h.astype(w2t_ref.dtype),
        dimension_numbers=(((1,), (1,)), ((), ())),
        preferred_element_type=jnp.float32)                   # (6, TM) f32
    pt = pt + b2t_ref[...]                                    # (6, 1) lane-broadcast

    # softplus on rows 0..2 (matches torch.nn.functional.softplus beta=1, threshold=20)
    pd = pt[0:3, :]
    d = jnp.where(pd > 20.0, pd, jnp.log1p(jnp.exp(jnp.minimum(pd, 20.0))))
    d0, d1, d2 = d[0:1, :], d[1:2, :], d[2:3, :]
    a, b, c = pt[3:4, :], pt[4:5, :], pt[5:6, :]

    # U = L^T @ L with L = [[d0, a, b], [0, d1, c], [0, 0, d2]]
    u00 = d0 * d0
    u01 = d0 * a
    u02 = d0 * b
    u11 = a * a + d1 * d1
    u12 = a * b + d1 * c
    u22 = b * b + c * c + d2 * d2

    # Row-major flattened symmetric 3x3, written as lane-dense (1, TM) row stores.
    odt = out_ref.dtype
    out_ref[0:1, :] = u00.astype(odt)
    out_ref[1:2, :] = u01.astype(odt)
    out_ref[2:3, :] = u02.astype(odt)
    out_ref[3:4, :] = u01.astype(odt)
    out_ref[4:5, :] = u11.astype(odt)
    out_ref[5:6, :] = u12.astype(odt)
    out_ref[6:7, :] = u02.astype(odt)
    out_ref[7:8, :] = u12.astype(odt)
    out_ref[8:9, :] = u22.astype(odt)


@functools.partial(jax.jit, static_argnames=("tm",))
def _cholesky_head_call(x, w1, b1, w2, b2, tm):
    m, d = x.shape
    d_hid = w1.shape[1]

    # Tiny wrapper-side reshapes/casts so the kernel needs no weight transposes.
    w1c = w1.astype(x.dtype)                     # (d, d_hid)
    b1r = b1.reshape(1, d_hid).astype(jnp.float32)
    w2t = w2.T.astype(x.dtype)                   # (6, d_hid)
    b2t = b2.reshape(6, 1).astype(jnp.float32)

    grid = (pl.cdiv(m, tm),)   # no wrapper pad: Pallas masks the ragged last block
    return pl.pallas_call(
        _cholesky_head_kernel,
        out_shape=jax.ShapeDtypeStruct((9, m), jnp.float32),
        grid=grid,
        in_specs=[
            pl.BlockSpec((tm, d), lambda i: (i, 0)),        # x tile (nodes on sublanes)
            pl.BlockSpec((d, d_hid), lambda i: (0, 0)),     # W1 (full, resident)
            pl.BlockSpec((1, d_hid), lambda i: (0, 0)),     # b1 row
            pl.BlockSpec((6, d_hid), lambda i: (0, 0)),     # W2^T
            pl.BlockSpec((6, 1), lambda i: (0, 0)),         # b2^T column
        ],
        out_specs=pl.BlockSpec((9, tm), lambda i: (0, i)),  # lane-dense output tile
        compiler_params=pltpu.CompilerParams(
            dimension_semantics=("parallel",),
            vmem_limit_bytes=48 * 1024 * 1024,
        ),
    )(x, w1c, b1r, w2t, b2t)


def _pick_tm(m, tm_max):
    """Multiple-of-128 row tile, capped at tm_max, sized so the grid has >=4 blocks
    when M allows it (v7x has 2 TensorCores; more blocks also hide DMA latency)."""
    if m < 256:
        return m                      # single whole-array block (full-dim shapes legal)
    tm = max(128, (m // 4) // 128 * 128)
    return min(tm, tm_max)


def cholesky_head(x_masked, w1, b1, w2, b2, tm_max=4096, packed=False):
    """x_masked: (M, dim_in) — already mask-selected node features.

    packed=False: returns (M, 3, 3)  (module semantics; costs one small transpose pass)
    packed=True : returns (3, 3, M)  (free contiguous view of the kernel output; element
                  [i, j, n] == U[n, i, j])
    """
    m = x_masked.shape[0]
    if m == 0:
        return jnp.zeros((3, 3, 0) if packed else (0, 3, 3), jnp.float32)
    tm = _pick_tm(m, tm_max)
    out9 = _cholesky_head_call(x_masked, w1, b1, w2, b2, tm=tm)     # (9, M)
    if packed:
        return out9.reshape(3, 3, m)         # free: contiguous, no HBM pass
    return out9.T.reshape(m, 3, 3)           # only layout pass, on the small output


def _reference(x_masked, w1, b1, w2, b2):
    h = x_masked @ w1 + b1
    h = h * jax.nn.sigmoid(h)
    p = h @ w2 + b2
    d = jax.nn.softplus(p[:, :3])
    n = p.shape[0]
    L = jnp.zeros((n, 3, 3), jnp.float32)
    L = L.at[:, 0, 0].set(d[:, 0]).at[:, 1, 1].set(d[:, 1]).at[:, 2, 2].set(d[:, 2])
    L = L.at[:, 0, 1].set(p[:, 3]).at[:, 0, 2].set(p[:, 4]).at[:, 1, 2].set(p[:, 5])
    return jnp.einsum("nij,nik->njk", L, L)


if __name__ == "__main__":
    dim_in = 32
    num_nodes = 256

    key = jax.random.PRNGKey(0)
    k_x, k_m, k_w1, k_b1, k_w2, k_b2 = jax.random.split(key, 6)

    # synthetic graph node features + non-hydrogen mask
    x = jax.random.normal(k_x, (num_nodes, dim_in), jnp.float32)
    non_H_mask = jax.random.bernoulli(k_m, 0.75, (num_nodes,))

    # deterministic parameter init (shapes from Cholesky_head.__init__)
    d_hid = dim_in // 2
    w1 = jax.random.normal(k_w1, (dim_in, d_hid), jnp.float32) * 0.2
    b1 = jax.random.normal(k_b1, (1, d_hid), jnp.float32) * 0.05
    w2 = jax.random.normal(k_w2, (d_hid, 6), jnp.float32) * 0.2
    b2 = jax.random.normal(k_b2, (1, 6), jnp.float32) * 0.05

    # masked gather (dynamic-shape) done eagerly in plain JAX glue
    x_masked = x[non_H_mask]
    m = x_masked.shape[0]

    u_ref = _reference(x_masked, w1, b1, w2, b2)

    # 1) small-M path: single whole-array block, (M, 3, 3) module-semantics output
    u = jax.block_until_ready(cholesky_head(x_masked, w1, b1, w2, b2))
    assert u.shape == (m, 3, 3)
    assert jnp.allclose(u, u_ref, atol=1e-5, rtol=1e-5)

    # 2) packed (3, 3, M) output: no wrapper transpose HBM pass
    up = jax.block_until_ready(cholesky_head(x_masked, w1, b1, w2, b2, packed=True))
    assert up.shape == (3, 3, m)
    assert jnp.allclose(jnp.transpose(up, (2, 0, 1)), u_ref, atol=1e-5, rtol=1e-5)

    # 3) multi-block tiled path (>= 4 grid steps, ragged last block)
    reps = 9
    x_big = jnp.concatenate([x_masked] * reps, axis=0)
    u_big_ref = jnp.concatenate([u_ref] * reps, axis=0)
    u_big = jax.block_until_ready(cholesky_head(x_big, w1, b1, w2, b2))
    assert u_big.shape == (reps * m, 3, 3)
    assert jnp.allclose(u_big, u_big_ref, atol=1e-5, rtol=1e-5)

    print("KERNEL_OK")
</pallas_src>

<mosaic_0001>
module attributes {stable_mosaic.version = 11 : i64} {
  func.func @_cholesky_head_kernel(%arg0: i32, %arg1: memref<198x32xf32, #tpu.memory_space<vmem>>, %arg2: memref<32x16xf32, #tpu.memory_space<vmem>>, %arg3: memref<1x16xf32, #tpu.memory_space<vmem>>, %arg4: memref<6x16xf32, #tpu.memory_space<vmem>>, %arg5: memref<6x1xf32, #tpu.memory_space<vmem>>, %arg6: memref<9x198xf32, #tpu.memory_space<vmem>>) attributes {dimension_semantics = [#tpu.dimension_semantics<parallel>], iteration_bounds = array<i64: 1>, scalar_prefetch = 0 : i64, scratch_operands = 0 : i64, tpu.core_type = #tpu.core_type<tc>, window_params = [{transform_indices = @transform_0, window_bounds = array<i64: 198, 32>}, {pipeline_mode = #tpu.pipeline_mode<synchronous>, transform_indices = @transform_1, window_bounds = array<i64: 32, 16>}, {pipeline_mode = #tpu.pipeline_mode<synchronous>, transform_indices = @transform_2, window_bounds = array<i64: 1, 16>}, {pipeline_mode = #tpu.pipeline_mode<synchronous>, transform_indices = @transform_3, window_bounds = array<i64: 6, 16>}, {pipeline_mode = #tpu.pipeline_mode<synchronous>, transform_indices = @transform_4, window_bounds = array<i64: 6, 1>}, {transform_indices = @transform_5, window_bounds = array<i64: 9, 198>}]} {
    %c0 = arith.constant 0 : index
    %c0_0 = arith.constant 0 : index
    %0 = vector.load %arg1[%c0, %c0_0] : memref<198x32xf32, #tpu.memory_space<vmem>>, vector<198x32xf32>
    %c0_1 = arith.constant 0 : index
    %c0_2 = arith.constant 0 : index
    %1 = vector.load %arg2[%c0_1, %c0_2] : memref<32x16xf32, #tpu.memory_space<vmem>>, vector<32x16xf32>
    %cst = arith.constant dense<0.000000e+00> : vector<198x16xf32>
    %2 = tpu.matmul %0, %1, %cst {dimension_numbers = #tpu.dot_dimension_numbers<[1], [0], [0], [1], [0, 0, 1, 1], [], []>} : vector<198x32xf32>, vector<32x16xf32>, vector<198x16xf32> -> vector<198x16xf32>
    %c0_3 = arith.constant 0 : index
    %c0_4 = arith.constant 0 : index
    %3 = vector.load %arg3[%c0_3, %c0_4] : memref<1x16xf32, #tpu.memory_space<vmem>>, vector<1x16xf32>
    %4 = vector.broadcast %3 : vector<1x16xf32> to vector<198x16xf32>
    %5 = arith.addf %2, %4 : vector<198x16xf32>
    %6 = arith.negf %5 : vector<198x16xf32>
    %7 = math.exp %6 : vector<198x16xf32>
    %cst_5 = arith.constant 1.000000e+00 : f32
    %8 = vector.broadcast %cst_5 : f32 to vector<198x16xf32>
    %9 = arith.addf %8, %7 : vector<198x16xf32>
    %10 = arith.divf %8, %9 : vector<198x16xf32>
    %11 = arith.mulf %5, %10 : vector<198x16xf32>
    %c0_6 = arith.constant 0 : index
    %c0_7 = arith.constant 0 : index
    %12 = vector.load %arg4[%c0_6, %c0_7] : memref<6x16xf32, #tpu.memory_space<vmem>>, vector<6x16xf32>
    %cst_8 = arith.constant dense<0.000000e+00> : vector<6x198xf32>
    %13 = tpu.matmul %12, %11, %cst_8 {dimension_numbers = #tpu.dot_dimension_numbers<[1], [1], [0], [0], [0, 0, 1, 0], [], []>} : vector<6x16xf32>, vector<198x16xf32>, vector<6x198xf32> -> vector<6x198xf32>
    %c0_9 = arith.constant 0 : index
    %c0_10 = arith.constant 0 : index
    %14 = vector.load %arg5[%c0_9, %c0_10] : memref<6x1xf32, #tpu.memory_space<vmem>>, vector<6x1xf32>
    %15 = vector.broadcast %14 : vector<6x1xf32> to vector<6x198xf32>
    %16 = arith.addf %13, %15 : vector<6x198xf32>
    %17 = vector.extract_strided_slice %16 {offsets = [0, 0], sizes = [3, 198], strides = [1, 1]} : vector<6x198xf32> to vector<3x198xf32>
    %cst_11 = arith.constant 2.000000e+01 : f32
    %18 = vector.broadcast %cst_11 : f32 to vector<3x198xf32>
    %19 = arith.cmpf ogt, %17, %18 : vector<3x198xf32>
    %cst_12 = arith.constant 2.000000e+01 : f32
    %20 = vector.broadcast %cst_12 : f32 to vector<3x198xf32>
    %21 = arith.minimumf %17, %20 : vector<3x198xf32>
    %22 = math.exp %21 : vector<3x198xf32>
    %23 = math.log1p %22 : vector<3x198xf32>
    %24 = arith.select %19, %17, %23 : vector<3x198xi1>, vector<3x198xf32>
    %25 = vector.extract_strided_slice %24 {offsets = [0, 0], sizes = [1, 198], strides = [1, 1]} : vector<3x198xf32> to vector<1x198xf32>
    %26 = vector.extract_strided_slice %24 {offsets = [1, 0], sizes = [1, 198], strides = [1, 1]} : vector<3x198xf32> to vector<1x198xf32>
    %27 = vector.extract_strided_slice %24 {offsets = [2, 0], sizes = [1, 198], strides = [1, 1]} : vector<3x198xf32> to vector<1x198xf32>
    %28 = vector.extract_strided_slice %16 {offsets = [3, 0], sizes = [1, 198], strides = [1, 1]} : vector<6x198xf32> to vector<1x198xf32>
    %29 = vector.extract_strided_slice %16 {offsets = [4, 0], sizes = [1, 198], strides = [1, 1]} : vector<6x198xf32> to vector<1x198xf32>
    %30 = vector.extract_strided_slice %16 {offsets = [5, 0], sizes = [1, 198], strides = [1, 1]} : vector<6x198xf32> to vector<1x198xf32>
    %31 = arith.mulf %25, %25 : vector<1x198xf32>
    %32 = arith.mulf %25, %28 : vector<1x198xf32>
    %33 = arith.mulf %25, %29 : vector<1x198xf32>
    %34 = arith.mulf %28, %28 : vector<1x198xf32>
    %35 = arith.mulf %26, %26 : vector<1x198xf32>
    %36 = arith.addf %34, %35 : vector<1x198xf32>
    %37 = arith.mulf %28, %29 : vector<1x198xf32>
    %38 = arith.mulf %26, %30 : vector<1x198xf32>
    %39 = arith.addf %37, %38 : vector<1x198xf32>
    %40 = arith.mulf %29, %29 : vector<1x198xf32>
    %41 = arith.mulf %30, %30 : vector<1x198xf32>
    %42 = arith.addf %40, %41 : vector<1x198xf32>
    %43 = arith.mulf %27, %27 : vector<1x198xf32>
    %44 = arith.addf %42, %43 : vector<1x198xf32>
    %c0_13 = arith.constant 0 : index
    %c0_14 = arith.constant 0 : index
    %45 = vector.load %arg6[%c0_13, %c0_14] : memref<9x198xf32, #tpu.memory_space<vmem>>, vector<1x198xf32>
    tpu.vector_store %arg6[%c0_13, %c0_14], %31 {strides = array<i32>} : memref<9x198xf32, #tpu.memory_space<vmem>>, vector<1x198xf32>,
    %c1 = arith.constant 1 : index
    %c0_15 = arith.constant 0 : index
    %46 = vector.load %arg6[%c1, %c0_15] : memref<9x198xf32, #tpu.memory_space<vmem>>, vector<1x198xf32>
    tpu.vector_store %arg6[%c1, %c0_15], %32 {strides = array<i32>} : memref<9x198xf32, #tpu.memory_space<vmem>>, vector<1x198xf32>,
    %c2 = arith.constant 2 : index
    %c0_16 = arith.constant 0 : index
    %47 = vector.load %arg6[%c2, %c0_16] : memref<9x198xf32, #tpu.memory_space<vmem>>, vector<1x198xf32>
    tpu.vector_store %arg6[%c2, %c0_16], %33 {strides = array<i32>} : memref<9x198xf32, #tpu.memory_space<vmem>>, vector<1x198xf32>,
    %c3 = arith.constant 3 : index
    %c0_17 = arith.constant 0 : index
    %48 = vector.load %arg6[%c3, %c0_17] : memref<9x198xf32, #tpu.memory_space<vmem>>, vector<1x198xf32>
    tpu.vector_store %arg6[%c3, %c0_17], %32 {strides = array<i32>} : memref<9x198xf32, #tpu.memory_space<vmem>>, vector<1x198xf32>,
    %c4 = arith.constant 4 : index
    %c0_18 = arith.constant 0 : index
    %49 = vector.load %arg6[%c4, %c0_18] : memref<9x198xf32, #tpu.memory_space<vmem>>, vector<1x198xf32>
    tpu.vector_store %arg6[%c4, %c0_18], %36 {strides = array<i32>} : memref<9x198xf32, #tpu.memory_space<vmem>>, vector<1x198xf32>,
    %c5 = arith.constant 5 : index
    %c0_19 = arith.constant 0 : index
    %50 = vector.load %arg6[%c5, %c0_19] : memref<9x198xf32, #tpu.memory_space<vmem>>, vector<1x198xf32>
    tpu.vector_store %arg6[%c5, %c0_19], %39 {strides = array<i32>} : memref<9x198xf32, #tpu.memory_space<vmem>>, vector<1x198xf32>,
    %c6 = arith.constant 6 : index
    %c0_20 = arith.constant 0 : index
    %51 = vector.load %arg6[%c6, %c0_20] : memref<9x198xf32, #tpu.memory_space<vmem>>, vector<1x198xf32>
    tpu.vector_store %arg6[%c6, %c0_20], %33 {strides = array<i32>} : memref<9x198xf32, #tpu.memory_space<vmem>>, vector<1x198xf32>,
    %c7 = arith.constant 7 : index
    %c0_21 = arith.constant 0 : index
    %52 = vector.load %arg6[%c7, %c0_21] : memref<9x198xf32, #tpu.memory_space<vmem>>, vector<1x198xf32>
    tpu.vector_store %arg6[%c7, %c0_21], %39 {strides = array<i32>} : memref<9x198xf32, #tpu.memory_space<vmem>>, vector<1x198xf32>,
    %c8 = arith.constant 8 : index
    %c0_22 = arith.constant 0 : index
    %53 = vector.load %arg6[%c8, %c0_22] : memref<9x198xf32, #tpu.memory_space<vmem>>, vector<1x198xf32>
    tpu.vector_store %arg6[%c8, %c0_22], %44 {strides = array<i32>} : memref<9x198xf32, #tpu.memory_space<vmem>>, vector<1x198xf32>,
    return
  }
  func.func @transform_0(%arg0: i32) -> (i32, i32) {
    %c0_i32 = arith.constant 0 : i32
    %c0_i32_0 = arith.constant 0 : i32
    return %arg0, %c0_i32 : i32, i32
  }
  func.func @transform_1(%arg0: i32) -> (i32, i32) {
    %c0_i32 = arith.constant 0 : i32
    %c0_i32_0 = arith.constant 0 : i32
    %c0_i32_1 = arith.constant 0 : i32
    return %c0_i32, %c0_i32_0 : i32, i32
  }
  func.func @transform_2(%arg0: i32) -> (i32, i32) {
    %c0_i32 = arith.constant 0 : i32
    %c0_i32_0 = arith.constant 0 : i32
    %c0_i32_1 = arith.constant 0 : i32
    return %c0_i32, %c0_i32_0 : i32, i32
  }
  func.func @transform_3(%arg0: i32) -> (i32, i32) {
    %c0_i32 = arith.constant 0 : i32
    %c0_i32_0 = arith.constant 0 : i32
    %c0_i32_1 = arith.constant 0 : i32
    return %c0_i32, %c0_i32_0 : i32, i32
  }
  func.func @transform_4(%arg0: i32) -> (i32, i32) {
    %c0_i32 = arith.constant 0 : i32
    %c0_i32_0 = arith.constant 0 : i32
    %c0_i32_1 = arith.constant 0 : i32
    return %c0_i32, %c0_i32_0 : i32, i32
  }
  func.func @transform_5(%arg0: i32) -> (i32, i32) {
    %c0_i32 = arith.constant 0 : i32
    %c0_i32_0 = arith.constant 0 : i32
    return %c0_i32, %arg0 : i32, i32
  }
}

</mosaic_0001>

<llo_original>
// kernel: _cholesky_head_call.1
$region0: #{_cholesky_head_call.1}
  #allocation0 [shape = 'u32[]', space=smem, size = 0x4, offset = 0x4, fixed_abs, tag = 'smem constant byte address 0x4 - core index']
  #allocation1 [shape = 'u32[144,128]{1,0:T(1,128)}', space=vmem, size = 0x12000, scoped, tag = 'internal scratch']
  %s0 = inlined_call_operand.vmem [shape: f32[198,32], index: 0, kind: input, shape index: {}]
  %s1 = inlined_call_operand.vmem [shape: f32[32,16], index: 1, kind: input, shape index: {}]
  %s2 = inlined_call_operand.vmem [shape: f32[1,16], index: 2, kind: input, shape index: {}]
  %s3 = inlined_call_operand.vmem [shape: f32[6,16], index: 3, kind: input, shape index: {}]
  %s4 = inlined_call_operand.vmem [shape: f32[6,1], index: 4, kind: input, shape index: {}]
  %s5 = inlined_call_operand.hbm [shape: f32[9,198], index: 5, kind: output, shape index: {}]
  %s6 = sld [smem:[#allocation0]]
  $region30: #{_cholesky_head_call.1} parent=0
    _
  %s8 = ssub.s32 1, %s6
  %s9 = scalar_select 0, %s8, %s6
  $region1: #{_cholesky_head_call.1} parent=0
    #allocation2 [shape = 'u8[16384]{0}', space=vmem, size = 0x4000, scoped, tag = 'output window, operand 0, single buffered']
    #allocation3 [shape = 's32[1]{0}', space=sflag, size = 0x4, scoped, tag = 'scoped memory for _cholesky_head_call.1']
    %10 = vsyncpa [#allocation3], 0
    // Predicated region
    $region2: #{_cholesky_head_call.1} parent=1 // pred_check
      _
    $region3: #{_cholesky_head_call.1} parent=1 // pred_check_branch
      %12 = sbr.rel (0) target = $region5
    $region4: #{_cholesky_head_call.1} parent=1 // pred_region
      _
    $region5: #{_cholesky_head_call.1} parent=1 // pred_fallthru
      _
    // Predicated region
    $region6: #{_cholesky_head_call.1} parent=1 // pred_check
      _
    $region7: #{_cholesky_head_call.1} parent=1 // pred_check_branch
      %14 = sbr.rel (0) target = $region9
    $region8: #{_cholesky_head_call.1} parent=1 // pred_region
      _
    $region9: #{_cholesky_head_call.1} parent=1 // pred_fallthru
      _
    // Predicated region
    $region10: #{_cholesky_head_call.1} parent=1 // pred_check
      _
    $region11: #{_cholesky_head_call.1} parent=1 // pred_check_branch
      %16 = sbr.rel (0) target = $region13
    $region12: #{_cholesky_head_call.1} parent=1 // pred_region
      _
    $region13: #{_cholesky_head_call.1} parent=1 // pred_fallthru
      _
    // Predicated region
    $region14: #{_cholesky_head_call.1} parent=1 // pred_check
      _
    $region15: #{_cholesky_head_call.1} parent=1 // pred_check_branch
      %18 = sbr.rel (0) target = $region17
    $region16: #{_cholesky_head_call.1} parent=1 // pred_region
      _
    $region17: #{_cholesky_head_call.1} parent=1 // pred_fallthru
      _
    // Predicated region
    $region18: #{_cholesky_head_call.1} parent=1 // pred_check
      _
    $region19: #{_cholesky_head_call.1} parent=1 // pred_check_branch
      %20 = sbr.rel (0) target = $region21
    $region20: #{_cholesky_head_call.1} parent=1 // pred_region
      _
    $region21: #{_cholesky_head_call.1} parent=1 // pred_fallthru
      _
    %v21 = vld [vmem:[%s0] sm:$0xff]
    %v22 = vld [vmem:[%s0 + $0x8] sm:$0xff]
    %v23 = vld [vmem:[%s0 + $0x10] sm:$0xff]
    %v24 = vld [vmem:[%s0 + $0x18] sm:$0xff]
    %v25 = vld [vmem:[%s0 + $0x20] sm:$0xff]
    %v26 = vld [vmem:[%s0 + $0x28] sm:$0xff]
    %v27 = vld [vmem:[%s0 + $0x30] sm:$0xff]
    %v28 = vld [vmem:[%s0 + $0x38] sm:$0xff]
    %v29 = vld [vmem:[%s0 + $0x40] sm:$0xff]
    %v30 = vld [vmem:[%s0 + $0x48] sm:$0xff]
    %v31 = vld [vmem:[%s0 + $0x50] sm:$0xff]
    %v32 = vld [vmem:[%s0 + $0x58] sm:$0xff]
    %v33 = vld [vmem:[%s0 + $0x60] sm:$0xff]
    %v34 = vld [vmem:[%s0 + $0x68] sm:$0xff]
    %v35 = vld [vmem:[%s0 + $0x70] sm:$0xff]
    %v36 = vld [vmem:[%s0 + $0x78] sm:$0xff]
    %v37 = vld [vmem:[%s0 + $0x80] sm:$0xff]
    %v38 = vld [vmem:[%s0 + $0x88] sm:$0xff]
    %v39 = vld [vmem:[%s0 + $0x90] sm:$0xff]
    %v40 = vld [vmem:[%s0 + $0x98] sm:$0xff]
    %v41 = vld [vmem:[%s0 + $0xa0] sm:$0xff]
    %v42 = vld [vmem:[%s0 + $0xa8] sm:$0xff]
    %v43 = vld [vmem:[%s0 + $0xb0] sm:$0xff]
    %v44 = vld [vmem:[%s0 + $0xb8] sm:$0xff]
    %v45 = vld [vmem:[%s0 + $0xc0] sm:$0x3f]
    %v46 = vld [vmem:[%s1] sm:$0xff]
    %v47 = vld [vmem:[%s1 + $0x8] sm:$0xff]
    %v48 = vld [vmem:[%s1 + $0x10] sm:$0xff]
    %v49 = vld [vmem:[%s1 + $0x18] sm:$0xff]
    %v50 = vld [vmem:[%s2] sm:$0x1]
    %v52 = vlaneseq
    %v53 = vshrl.u32 %v52, 7
    %v54 = vsub.s32 0, %v53
    %v55 = vrot.slane %v50, %v54
    %vm57 = vcmask 261120
    %v59 = vsel %vm57, %v21, 0
    %v62 = vsel %vm57, %v22, 0
    %v65 = vsel %vm57, %v23, 0
    %v68 = vsel %vm57, %v24, 0
    %v71 = vsel %vm57, %v25, 0
    %v74 = vsel %vm57, %v26, 0
    %v77 = vsel %vm57, %v27, 0
    %v80 = vsel %vm57, %v28, 0
    %v83 = vsel %vm57, %v29, 0
    %v86 = vsel %vm57, %v30, 0
    %v89 = vsel %vm57, %v31, 0
    %v92 = vsel %vm57, %v32, 0
    %v95 = vsel %vm57, %v33, 0
    %v98 = vsel %vm57, %v34, 0
    %v101 = vsel %vm57, %v35, 0
    %v104 = vsel %vm57, %v36, 0
    %v107 = vsel %vm57, %v37, 0
    %v110 = vsel %vm57, %v38, 0
    %v113 = vsel %vm57, %v39, 0
    %v116 = vsel %vm57, %v40, 0
    %v119 = vsel %vm57, %v41, 0
    %v122 = vsel %vm57, %v42, 0
    %v125 = vsel %vm57, %v43, 0
    %v128 = vsel %vm57, %v44, 0
    %v131 = vsel %vm57, %v45, 0
    %133 = vmatprep.subr.mxu0 0.0
    %134 = vmatpush1.msra.mxu0 0.0
    %135 = vmatprep.subr.mxu0 0.0
    %136 = vmatpush1.msra.mxu0 0.0
    %137 = vmatprep.subr.mxu0 0.0
    %138 = vmatpush1.msra.mxu0 0.0
    %139 = vmatprep.subr.mxu0 0.0
    %140 = vmatpush1.msra.mxu0 0.0
    %141 = vmatprep.subr.mxu0 0.0
    %142 = vmatpush1.msra.mxu0 0.0
    %143 = vmatprep.subr.mxu0 0.0
    %144 = vmatpush1.msra.mxu0 0.0
    %145 = vmatprep.subr.mxu0 0.0
    %146 = vmatpush1.msra.mxu0 0.0
    %147 = vmatprep.subr.mxu0 0.0
    %148 = vmatpush1.msra.mxu0 0.0
    %149 = vmatprep.subr.mxu0 0.0
    %150 = vmatpush1.msra.mxu0 0.0
    %151 = vmatprep.subr.mxu0 0.0
    %152 = vmatpush1.msra.mxu0 0.0
    %153 = vmatprep.subr.mxu0 0.0
    %154 = vmatpush1.msra.mxu0 0.0
    %155 = vmatprep.subr.mxu0 0.0
    %156 = vmatpush1.msra.mxu0 0.0
    %157 = vmatprep.subr.mxu0 0.0
    %158 = vmatpush1.msra.mxu0 %v49
    %159 = vmatprep.subr.mxu0 0.0
    %160 = vmatpush1.msra.mxu0 %v48
    %161 = vmatprep.subr.mxu0 0.0
    %162 = vmatpush1.msra.mxu0 %v47
    %163 = vmatprep.subr.mxu0 0.0
    %164 = vmatpush1.msra.mxu0 %v46
    %165 = vmatprep.subr.mxu0 0.0
    %166 = vmatpush2.msra.mxu0 0.0
    %167 = vmatprep.subr.mxu0 0.0
    %168 = vmatpush2.msra.mxu0 0.0
    %169 = vmatprep.subr.mxu0 0.0
    %170 = vmatpush2.msra.mxu0 0.0
    %171 = vmatprep.subr.mxu0 0.0
    %172 = vmatpush2.msra.mxu0 0.0
    %173 = vmatprep.subr.mxu0 0.0
    %174 = vmatpush2.msra.mxu0 0.0
    %175 = vmatprep.subr.mxu0 0.0
    %176 = vmatpush2.msra.mxu0 0.0
    %177 = vmatprep.subr.mxu0 0.0
    %178 = vmatpush2.msra.mxu0 0.0
    %179 = vmatprep.subr.mxu0 0.0
    %180 = vmatpush2.msra.mxu0 0.0
    %181 = vmatprep.subr.mxu0 0.0
    %182 = vmatpush2.msra.mxu0 0.0
    %183 = vmatprep.subr.mxu0 0.0
    %184 = vmatpush2.msra.mxu0 0.0
    %185 = vmatprep.subr.mxu0 0.0
    %186 = vmatpush2.msra.mxu0 0.0
    %187 = vmatprep.subr.mxu0 0.0
    %188 = vmatpush2.msra.mxu0 0.0
    %189 = vmatprep.subr.mxu0 0.0
    %190 = vmatpush2.msra.mxu0 0.0
    %191 = vmatprep.subr.mxu0 0.0
    %192 = vmatpush2.msra.mxu0 0.0
    %193 = vmatprep.subr.mxu0 0.0
    %194 = vmatpush2.msra.mxu0 0.0
    %195 = vmatprep.subr.mxu0 0.0
    %196 = vmatpush2.msra.mxu0 0.0
    %197 = vmatprep.mubr.f32.mxu0 0.0
    %198 = vmatmul.mubr.f32.gmra.mxu0 %v59
    %v199 = vpop.f32.mrf.mxu0
    %v200 = vadd.f32 %v55, %v199
    %v201 = vpop.f32.mrf.mxu0
    %202 = vmatprep.mubr.f32.mxu0 0.0
    %203 = vmatmul.mubr.f32.gmra.mxu0 %v62
    %v204 = vpop.f32.mrf.mxu0
    %v205 = vadd.f32 %v55, %v204
    %v206 = vpop.f32.mrf.mxu0
    %207 = vmatprep.mubr.f32.mxu0 0.0
    %208 = vmatmul.mubr.f32.gmra.mxu0 %v65
    %v209 = vpop.f32.mrf.mxu0
    %v210 = vadd.f32 %v55, %v209
    %v211 = vpop.f32.mrf.mxu0
    %212 = vmatprep.mubr.f32.mxu0 0.0
    %213 = vmatmul.mubr.f32.gmra.mxu0 %v68
    %v214 = vpop.f32.mrf.mxu0
    %v215 = vadd.f32 %v55, %v214
    %v216 = vpop.f32.mrf.mxu0
    %217 = vmatprep.mubr.f32.mxu0 0.0
    %218 = vmatmul.mubr.f32.gmra.mxu0 %v71
    %v219 = vpop.f32.mrf.mxu0
    %v220 = vadd.f32 %v55, %v219
    %v221 = vpop.f32.mrf.mxu0
    %222 = vmatprep.mubr.f32.mxu0 0.0
    %223 = vmatmul.mubr.f32.gmra.mxu0 %v74
    %v224 = vpop.f32.mrf.mxu0
    %v225 = vadd.f32 %v55, %v224
    %v226 = vpop.f32.mrf.mxu0
    %227 = vmatprep.mubr.f32.mxu0 0.0
    %228 = vmatmul.mubr.f32.gmra.mxu0 %v77
    %v229 = vpop.f32.mrf.mxu0
    %v230 = vadd.f32 %v55, %v229
    %v231 = vpop.f32.mrf.mxu0
    %232 = vmatprep.mubr.f32.mxu0 0.0
    %233 = vmatmul.mubr.f32.gmra.mxu0 %v80
    %v234 = vpop.f32.mrf.mxu0
    %v235 = vadd.f32 %v55, %v234
    %v236 = vpop.f32.mrf.mxu0
    %237 = vmatprep.mubr.f32.mxu0 0.0
    %238 = vmatmul.mubr.f32.gmra.mxu0 %v83
    %v239 = vpop.f32.mrf.mxu0
    %v240 = vadd.f32 %v55, %v239
    %v241 = vpop.f32.mrf.mxu0
    %242 = vmatprep.mubr.f32.mxu0 0.0
    %243 = vmatmul.mubr.f32.gmra.mxu0 %v86
    %v244 = vpop.f32.mrf.mxu0
    %v245 = vadd.f32 %v55, %v244
    %v246 = vpop.f32.mrf.mxu0
    %247 = vmatprep.mubr.f32.mxu0 0.0
    %248 = vmatmul.mubr.f32.gmra.mxu0 %v89
    %v249 = vpop.f32.mrf.mxu0
    %v250 = vadd.f32 %v55, %v249
    %v251 = vpop.f32.mrf.mxu0
    %252 = vmatprep.mubr.f32.mxu0 0.0
    %253 = vmatmul.mubr.f32.gmra.mxu0 %v92
    %v254 = vpop.f32.mrf.mxu0
    %v255 = vadd.f32 %v55, %v254
    %v256 = vpop.f32.mrf.mxu0
    %257 = vmatprep.mubr.f32.mxu0 0.0
    %258 = vmatmul.mubr.f32.gmra.mxu0 %v95
    %v259 = vpop.f32.mrf.mxu0
    %v260 = vadd.f32 %v55, %v259
    %v261 = vpop.f32.mrf.mxu0
    %262 = vmatprep.mubr.f32.mxu0 0.0
    %263 = vmatmul.mubr.f32.gmra.mxu0 %v98
    %v264 = vpop.f32.mrf.mxu0
    %v265 = vadd.f32 %v55, %v264
    %v266 = vpop.f32.mrf.mxu0
    %267 = vmatprep.mubr.f32.mxu0 0.0
    %268 = vmatmul.mubr.f32.gmra.mxu0 %v101
    %v269 = vpop.f32.mrf.mxu0
    %v270 = vadd.f32 %v55, %v269
    %v271 = vpop.f32.mrf.mxu0
    %272 = vmatprep.mubr.f32.mxu0 0.0
    %273 = vmatmul.mubr.f32.gmra.mxu0 %v104
    %v274 = vpop.f32.mrf.mxu0
    %v275 = vadd.f32 %v55, %v274
    %v276 = vpop.f32.mrf.mxu0
    %277 = vmatprep.mubr.f32.mxu0 0.0
    %278 = vmatmul.mubr.f32.gmra.mxu0 %v107
    %v279 = vpop.f32.mrf.mxu0
    %v280 = vadd.f32 %v55, %v279
    %v281 = vpop.f32.mrf.mxu0
    %282 = vmatprep.mubr.f32.mxu0 0.0
    %283 = vmatmul.mubr.f32.gmra.mxu0 %v110
    %v284 = vpop.f32.mrf.mxu0
    %v285 = vadd.f32 %v55, %v284
    %v286 = vpop.f32.mrf.mxu0
    %287 = vmatprep.mubr.f32.mxu0 0.0
    %288 = vmatmul.mubr.f32.gmra.mxu0 %v113
    %v289 = vpop.f32.mrf.mxu0
    %v290 = vadd.f32 %v55, %v289
    %v291 = vpop.f32.mrf.mxu0
    %292 = vmatprep.mubr.f32.mxu0 0.0
    %293 = vmatmul.mubr.f32.gmra.mxu0 %v116
    %v294 = vpop.f32.mrf.mxu0
    %v295 = vadd.f32 %v55, %v294
    %v296 = vpop.f32.mrf.mxu0
    %297 = vmatprep.mubr.f32.mxu0 0.0
    %298 = vmatmul.mubr.f32.gmra.mxu0 %v119
    %v299 = vpop.f32.mrf.mxu0
    %v300 = vadd.f32 %v55, %v299
    %v301 = vpop.f32.mrf.mxu0
    %302 = vmatprep.mubr.f32.mxu0 0.0
    %303 = vmatmul.mubr.f32.gmra.mxu0 %v122
    %v304 = vpop.f32.mrf.mxu0
    %v305 = vadd.f32 %v55, %v304
    %v306 = vpop.f32.mrf.mxu0
    %307 = vmatprep.mubr.f32.mxu0 0.0
    %308 = vmatmul.mubr.f32.gmra.mxu0 %v125
    %v309 = vpop.f32.mrf.mxu0
    %v310 = vadd.f32 %v55, %v309
    %v311 = vpop.f32.mrf.mxu0
    %312 = vmatprep.mubr.f32.mxu0 0.0
    %313 = vmatmul.mubr.f32.gmra.mxu0 %v128
    %v314 = vpop.f32.mrf.mxu0
    %v315 = vadd.f32 %v55, %v314
    %v316 = vpop.f32.mrf.mxu0
    %317 = vmatprep.mubr.f32.mxu0 0.0
    %318 = vmatmul.mubr.f32.gmra.mxu0 %v131
    %v319 = vpop.f32.mrf.mxu0
    %v320 = vadd.f32 %v55, %v319
    %v321 = vpop.f32.mrf.mxu0
    %322 = vdwg.mxu0
    %v323 = vxor.u32 %v200, 2147483648
    %v324 = vxor.u32 %v205, 2147483648
    %v325 = vxor.u32 %v210, 2147483648
    %v326 = vxor.u32 %v215, 2147483648
    %v327 = vxor.u32 %v220, 2147483648
    %v328 = vxor.u32 %v225, 2147483648
    %v329 = vxor.u32 %v230, 2147483648
    %v330 = vxor.u32 %v235, 2147483648
    %v331 = vxor.u32 %v240, 2147483648
    %v332 = vxor.u32 %v245, 2147483648
    %v333 = vxor.u32 %v250, 2147483648
    %v334 = vxor.u32 %v255, 2147483648
    %v335 = vxor.u32 %v260, 2147483648
    %v336 = vxor.u32 %v265, 2147483648
    %v337 = vxor.u32 %v270, 2147483648
    %v338 = vxor.u32 %v275, 2147483648
    %v339 = vxor.u32 %v280, 2147483648
    %v340 = vxor.u32 %v285, 2147483648
    %v341 = vxor.u32 %v290, 2147483648
    %v342 = vxor.u32 %v295, 2147483648
    %v343 = vxor.u32 %v300, 2147483648
    %v344 = vxor.u32 %v305, 2147483648
    %v345 = vxor.u32 %v310, 2147483648
    %v346 = vxor.u32 %v315, 2147483648
    %v347 = vxor.u32 %v320, 2147483648
    %v348 = vmul.f32 %v323, 1.442695
    %v349 = vpow.pop %v348
    %v350 = vmul.f32 %v324, 1.442695
    %v351 = vpow.pop %v350
    %v352 = vmul.f32 %v325, 1.442695
    %v353 = vpow.pop %v352
    %v354 = vmul.f32 %v326, 1.442695
    %v355 = vpow.pop %v354
    %v356 = vmul.f32 %v327, 1.442695
    %v357 = vpow.pop %v356
    %v358 = vmul.f32 %v328, 1.442695
    %v359 = vpow.pop %v358
    %v360 = vmul.f32 %v329, 1.442695
    %v361 = vpow.pop %v360
    %v362 = vmul.f32 %v330, 1.442695
    %v363 = vpow.pop %v362
    %v364 = vmul.f32 %v331, 1.442695
    %v365 = vpow.pop %v364
    %v366 = vmul.f32 %v332, 1.442695
    %v367 = vpow.pop %v366
    %v368 = vmul.f32 %v333, 1.442695
    %v369 = vpow.pop %v368
    %v370 = vmul.f32 %v334, 1.442695
    %v371 = vpow.pop %v370
    %v372 = vmul.f32 %v335, 1.442695
    %v373 = vpow.pop %v372
    %v374 = vmul.f32 %v336, 1.442695
    %v375 = vpow.pop %v374
    %v376 = vmul.f32 %v337, 1.442695
    %v377 = vpow.pop %v376
    %v378 = vmul.f32 %v338, 1.442695
    %v379 = vpow.pop %v378
    %v380 = vmul.f32 %v339, 1.442695
    %v381 = vpow.pop %v380
    %v382 = vmul.f32 %v340, 1.442695
    %v383 = vpow.pop %v382
    %v384 = vmul.f32 %v341, 1.442695
    %v385 = vpow.pop %v384
    %v386 = vmul.f32 %v342, 1.442695
    %v387 = vpow.pop %v386
    %v388 = vmul.f32 %v343, 1.442695
    %v389 = vpow.pop %v388
    %v390 = vmul.f32 %v344, 1.442695
    %v391 = vpow.pop %v390
    %v392 = vmul.f32 %v345, 1.442695
    %v393 = vpow.pop %v392
    %v394 = vmul.f32 %v346, 1.442695
    %v395 = vpow.pop %v394
    %v396 = vmul.f32 %v347, 1.442695
    %v397 = vpow.pop %v396
    %v398 = vadd.f32 %v349, 1.0
    %v399 = vadd.f32 %v351, 1.0
    %v400 = vadd.f32 %v353, 1.0
    %v401 = vadd.f32 %v355, 1.0
    %v402 = vadd.f32 %v357, 1.0
    %v403 = vadd.f32 %v359, 1.0
    %v404 = vadd.f32 %v361, 1.0
    %v405 = vadd.f32 %v363, 1.0
    %v406 = vadd.f32 %v365, 1.0
    %v407 = vadd.f32 %v367, 1.0
    %v408 = vadd.f32 %v369, 1.0
    %v409 = vadd.f32 %v371, 1.0
    %v410 = vadd.f32 %v373, 1.0
    %v411 = vadd.f32 %v375, 1.0
    %v412 = vadd.f32 %v377, 1.0
    %v413 = vadd.f32 %v379, 1.0
    %v414 = vadd.f32 %v381, 1.0
    %v415 = vadd.f32 %v383, 1.0
    %v416 = vadd.f32 %v385, 1.0
    %v417 = vadd.f32 %v387, 1.0
    %v418 = vadd.f32 %v389, 1.0
    %v419 = vadd.f32 %v391, 1.0
    %v420 = vadd.f32 %v393, 1.0
    %v421 = vadd.f32 %v395, 1.0
    %v422 = vadd.f32 %v397, 1.0
    %v423 = vrcp.pop %v398
    %v424 = vmul.f32 1.0, %v423
    %v425 = vrcp.pop %v399
    %v426 = vmul.f32 1.0, %v425
    %v427 = vrcp.pop %v400
    %v428 = vmul.f32 1.0, %v427
    %v429 = vrcp.pop %v401
    %v430 = vmul.f32 1.0, %v429
    %v431 = vrcp.pop %v402
    %v432 = vmul.f32 1.0, %v431
    %v433 = vrcp.pop %v403
    %v434 = vmul.f32 1.0, %v433
    %v435 = vrcp.pop %v404
    %v436 = vmul.f32 1.0, %v435
    %v437 = vrcp.pop %v405
    %v438 = vmul.f32 1.0, %v437
    %v439 = vrcp.pop %v406
    %v440 = vmul.f32 1.0, %v439
    %v441 = vrcp.pop %v407
    %v442 = vmul.f32 1.0, %v441
    %v443 = vrcp.pop %v408
    %v444 = vmul.f32 1.0, %v443
    %v445 = vrcp.pop %v409
    %v446 = vmul.f32 1.0, %v445
    %v447 = vrcp.pop %v410
    %v448 = vmul.f32 1.0, %v447
    %v449 = vrcp.pop %v411
    %v450 = vmul.f32 1.0, %v449
    %v451 = vrcp.pop %v412
    %v452 = vmul.f32 1.0, %v451
    %v453 = vrcp.pop %v413
    %v454 = vmul.f32 1.0, %v453
    %v455 = vrcp.pop %v414
    %v456 = vmul.f32 1.0, %v455
    %v457 = vrcp.pop %v415
    %v458 = vmul.f32 1.0, %v457
    %v459 = vrcp.pop %v416
    %v460 = vmul.f32 1.0, %v459
    %v461 = vrcp.pop %v417
    %v462 = vmul.f32 1.0, %v461
    %v463 = vrcp.pop %v418
    %v464 = vmul.f32 1.0, %v463
    %v465 = vrcp.pop %v419
    %v466 = vmul.f32 1.0, %v465
    %v467 = vrcp.pop %v420
    %v468 = vmul.f32 1.0, %v467
    %v469 = vrcp.pop %v421
    %v470 = vmul.f32 1.0, %v469
    %v471 = vrcp.pop %v422
    %v472 = vmul.f32 1.0, %v471
    %v473 = vmul.f32 %v200, %v424
    %v474 = vmul.f32 %v205, %v426
    %v475 = vmul.f32 %v210, %v428
    %v476 = vmul.f32 %v215, %v430
    %v477 = vmul.f32 %v220, %v432
    %v478 = vmul.f32 %v225, %v434
    %v479 = vmul.f32 %v230, %v436
    %v480 = vmul.f32 %v235, %v438
    %v481 = vmul.f32 %v240, %v440
    %v482 = vmul.f32 %v245, %v442
    %v483 = vmul.f32 %v250, %v444
    %v484 = vmul.f32 %v255, %v446
    %v485 = vmul.f32 %v260, %v448
    %v486 = vmul.f32 %v265, %v450
    %v487 = vmul.f32 %v270, %v452
    %v488 = vmul.f32 %v275, %v454
    %v489 = vmul.f32 %v280, %v456
    %v490 = vmul.f32 %v285, %v458
    %v491 = vmul.f32 %v290, %v460
    %v492 = vmul.f32 %v295, %v462
    %v493 = vmul.f32 %v300, %v464
    %v494 = vmul.f32 %v305, %v466
    %v495 = vmul.f32 %v310, %v468
    %v496 = vmul.f32 %v315, %v470
    %v497 = vmul.f32 %v320, %v472
    %v498 = vld [vmem:[%s3] sm:$0x3f]
    %v499 = vld [vmem:[%s4] sm:$0x3f]
    %501 = vset.pattern.permute.xlu0 0
    %502 = vperm.xlu0 %501, %v499
    %v503 = vpop.permute.xlu0 %502
    %vm505 = vcmask 130048
    %v507 = vsel %vm505, %v498, 0
    %v510 = vsel %vm505, %v473, 0
    %v513 = vsel %vm505, %v474, 0
    %v516 = vsel %vm505, %v475, 0
    %v519 = vsel %vm505, %v476, 0
    %v522 = vsel %vm505, %v477, 0
    %v525 = vsel %vm505, %v478, 0
    %v528 = vsel %vm505, %v479, 0
    %v531 = vsel %vm505, %v480, 0
    %v534 = vsel %vm505, %v481, 0
    %v537 = vsel %vm505, %v482, 0
    %v540 = vsel %vm505, %v483, 0
    %v543 = vsel %vm505, %v484, 0
    %v546 = vsel %vm505, %v485, 0
    %v549 = vsel %vm505, %v486, 0
    %v552 = vsel %vm505, %v487, 0
    %v555 = vsel %vm505, %v488, 0
    %v558 = vsel %vm505, %v489, 0
    %v561 = vsel %vm505, %v490, 0
    %v564 = vsel %vm505, %v491, 0
    %v567 = vsel %vm505, %v492, 0
    %v570 = vsel %vm505, %v493, 0
    %v573 = vsel %vm505, %v494, 0
    %v576 = vsel %vm505, %v495, 0
    %v579 = vsel %vm505, %v496, 0
    %v582 = vsel %vm505, %v497, 0
    %584 = vmatprep.subr.mxu0 0.0
    %585 = vmatpush1.xpose.msra.mxu0 %v555
    %586 = vmatprep.subr.mxu0 0.0
    %587 = vmatpush1.xpose.msra.mxu0 %v552
    %588 = vmatprep.subr.mxu0 0.0
    %589 = vmatpush1.xpose.msra.mxu0 %v549
    %590 = vmatprep.subr.mxu0 0.0
    %591 = vmatpush1.xpose.msra.mxu0 %v546
    %592 = vmatprep.subr.mxu0 0.0
    %593 = vmatpush1.xpose.msra.mxu0 %v543
    %594 = vmatprep.subr.mxu0 0.0
    %595 = vmatpush1.xpose.msra.mxu0 %v540
    %596 = vmatprep.subr.mxu0 0.0
    %597 = vmatpush1.xpose.msra.mxu0 %v537
    %598 = vmatprep.subr.mxu0 0.0
    %599 = vmatpush1.xpose.msra.mxu0 %v534
    %600 = vmatprep.subr.mxu0 0.0
    %601 = vmatpush1.xpose.msra.mxu0 %v531
    %602 = vmatprep.subr.mxu0 0.0
    %603 = vmatpush1.xpose.msra.mxu0 %v528
    %604 = vmatprep.subr.mxu0 0.0
    %605 = vmatpush1.xpose.msra.mxu0 %v525
    %606 = vmatprep.subr.mxu0 0.0
    %607 = vmatpush1.xpose.msra.mxu0 %v522
    %608 = vmatprep.subr.mxu0 0.0
    %609 = vmatpush1.xpose.msra.mxu0 %v519
    %610 = vmatprep.subr.mxu0 0.0
    %611 = vmatpush1.xpose.msra.mxu0 %v516
    %612 = vmatprep.subr.mxu0 0.0
    %613 = vmatpush1.xpose.msra.mxu0 %v513
    %614 = vmatprep.subr.mxu0 0.0
    %615 = vmatpush1.xpose.msra.mxu0 %v510
    %616 = vmatprep.subr.mxu0 0.0
    %617 = vmatpush2.xpose.msra.mxu0 0.0
    %618 = vmatprep.subr.mxu0 0.0
    %619 = vmatpush2.xpose.msra.mxu0 0.0
    %620 = vmatprep.subr.mxu0 0.0
    %621 = vmatpush2.xpose.msra.mxu0 0.0
    %622 = vmatprep.subr.mxu0 0.0
    %623 = vmatpush2.xpose.msra.mxu0 0.0
    %624 = vmatprep.subr.mxu0 0.0
    %625 = vmatpush2.xpose.msra.mxu0 0.0
    %626 = vmatprep.subr.mxu0 0.0
    %627 = vmatpush2.xpose.msra.mxu0 0.0
    %628 = vmatprep.subr.mxu0 0.0
    %629 = vmatpush2.xpose.msra.mxu0 0.0
    %630 = vmatprep.subr.mxu0 0.0
    %631 = vmatpush2.xpose.msra.mxu0 %v582
    %632 = vmatprep.subr.mxu0 0.0
    %633 = vmatpush2.xpose.msra.mxu0 %v579
    %634 = vmatprep.subr.mxu0 0.0
    %635 = vmatpush2.xpose.msra.mxu0 %v576
    %636 = vmatprep.subr.mxu0 0.0
    %637 = vmatpush2.xpose.msra.mxu0 %v573
    %638 = vmatprep.subr.mxu0 0.0
    %639 = vmatpush2.xpose.msra.mxu0 %v570
    %640 = vmatprep.subr.mxu0 0.0
    %641 = vmatpush2.xpose.msra.mxu0 %v567
    %642 = vmatprep.subr.mxu0 0.0
    %643 = vmatpush2.xpose.msra.mxu0 %v564
    %644 = vmatprep.subr.mxu0 0.0
    %645 = vmatpush2.xpose.msra.mxu0 %v561
    %646 = vmatprep.subr.mxu0 0.0
    %647 = vmatpush2.xpose.msra.mxu0 %v558
    %648 = vmatprep.mubr.f32.mxu0 0.0
    %649 = vmatmul.mubr.f32.gmra.mxu0 %v507
    %v650 = vpop.f32.mrf.mxu0
    %v651 = vadd.f32 %v503, %v650
    %v652 = vpop.f32.mrf.mxu0
    %v653 = vadd.f32 %v503, %v652
    %654 = vdwg.mxu0
    %vm655 = vcmp.gt.f32.partialorder %v651, 20.0
    %vm656 = vcmp.gt.f32.partialorder %v653, 20.0
    %v657 = vmin.f32 %v651, 20.0
    %v658 = vmin.f32 %v653, 20.0
    %v659 = vmul.f32 %v657, 1.442695
    %v660 = vpow.pop %v659
    %v661 = vmul.f32 %v658, 1.442695
    %v662 = vpow.pop %v661
    %v663 = vadd.f32 %v660, 1.0
    %v664 = vlog2.pop %v663
    %v665 = vmul.f32 %v664, 0.6931472
    %v666 = vmul.f32 -0.5, %v660
    %v667 = vadd.f32 %v666, 1.0
    %v668 = vmul.f32 %v667, %v660
    %v669 = vand.u32 2147483647, %v660
    %vm670 = vcmp.lt.f32.partialorder %v669, 0.0004427343
    %v671 = vsel %vm670, %v668, %v665
    %v672 = vadd.f32 %v662, 1.0
    %v673 = vlog2.pop %v672
    %v674 = vmul.f32 %v673, 0.6931472
    %v675 = vmul.f32 -0.5, %v662
    %v676 = vadd.f32 %v675, 1.0
    %v677 = vmul.f32 %v676, %v662
    %v678 = vand.u32 2147483647, %v662
    %vm679 = vcmp.lt.f32.partialorder %v678, 0.0004427343
    %v680 = vsel %vm679, %v677, %v674
    %v681 = vsel %vm655, %v651, %v671
    %v682 = vsel %vm656, %v653, %v680
    %v683 = vmul.f32 %v681, %v681
    %v684 = vmul.f32 %v682, %v682
    %v687 = vrot.slane %v651, 3
    %v688 = vrot.slane %v653, 3
    %v691 = vmul.f32 %v681, %v687
    %v692 = vmul.f32 %v682, %v688
    %v693 = vrot.slane %v651, 4
    %v694 = vrot.slane %v653, 4
    %v697 = vmul.f32 %v681, %v693
    %v698 = vmul.f32 %v682, %v694
    %v699 = vmul.f32 %v651, %v651
    %v700 = vmul.f32 %v653, %v653
    %v703 = vrot.slane %v683, 6
    %v704 = vrot.slane %v684, 6
    %v707 = vadd.f32 %v699, %v703
    %v708 = vadd.f32 %v700, %v704
    %v709 = vrot.slane %v651, 1
    %v710 = vrot.slane %v653, 1
    %v713 = vmul.f32 %v651, %v709
    %v714 = vmul.f32 %v653, %v710
    %v717 = vrot.slane %v697, 6
    %v718 = vrot.slane %v698, 6
    %v721 = vadd.f32 %v713, %v717
    %v722 = vadd.f32 %v714, %v718
    %v725 = vrot.slane %v699, 1
    %v726 = vrot.slane %v700, 1
    %v729 = vadd.f32 %v699, %v725
    %v730 = vadd.f32 %v700, %v726
    %v731 = vadd.f32 %v729, %v703
    %v732 = vadd.f32 %v730, %v704
    %v733 = vcombine.low %v683, %v684
    %v735 = vunpack.c.l.s4 1966171168
    %v736 = vunpack.c.0.s8 %v735
    %v737 = vlaneseq
    %v738 = vshrl.u32 %v737, 7
    %v739 = vsub.s32 %v736, %v738
    %v740 = vrot.slane %v733, %v739
    %v742 = vunpack.c.l.s4 1966171168
    %v743 = vunpack.c.0.s8 %v742
    %v744 = vlaneseq
    %v745 = vshrl.u32 %v744, 7
    %v746 = vsub.s32 %v743, %v745
    %v747 = vrot.slane %v740, %v746
    %v749 = vlaneseq
    %vm750 = vcmp.ge.s32.totalorder %v749, 0
    %vm751 = vcmp.lt.s32.totalorder %v749, 198
    %vm752 = vmand %vm750, %vm751
    %753 = vst.msk [vmem:[#allocation2] ss:$8 sm:$0x3] %vm752, %v747
    %754 = vst.msk [vmem:[#allocation2] ss:$8 sm:$0x0] %vm752, %v747
    %v757 = vcombine.low %v691, %v692
    %v759 = vunpack.c.l.s4 1966171168
    %v760 = vunpack.c.0.s8 %v759
    %v761 = vlaneseq
    %v762 = vshrl.u32 %v761, 7
    %v763 = vsub.s32 %v760, %v762
    %v764 = vrot.slane %v757, %v763
    %v766 = vunpack.c.l.s4 1966171168
    %v767 = vunpack.c.0.s8 %v766
    %v768 = vlaneseq
    %v769 = vshrl.u32 %v768, 7
    %v770 = vsub.s32 %v767, %v769
    %v771 = vrot.slane %v764, %v770
    %s773 = scalar_lea.vmem [#allocation2], 1
    %774 = vst.msk [vmem:[%s773] ss:$8 sm:$0x3] %vm752, %v771
    %775 = vst.msk [vmem:[%s773] ss:$8 sm:$0x0] %vm752, %v771
    %v776 = vcombine.low %v697, %v698
    %v778 = vunpack.c.l.s4 1966171168
    %v779 = vunpack.c.0.s8 %v778
    %v780 = vlaneseq
    %v781 = vshrl.u32 %v780, 7
    %v782 = vsub.s32 %v779, %v781
    %v783 = vrot.slane %v776, %v782
    %v785 = vunpack.c.l.s4 1966171168
    %v786 = vunpack.c.0.s8 %v785
    %v787 = vlaneseq
    %v788 = vshrl.u32 %v787, 7
    %v789 = vsub.s32 %v786, %v788
    %v790 = vrot.slane %v783, %v789
    %s792 = scalar_lea.vmem [#allocation2], 2
    %793 = vst.msk [vmem:[%s792] ss:$8 sm:$0x3] %vm752, %v790
    %794 = vst.msk [vmem:[%s792] ss:$8 sm:$0x0] %vm752, %v790
    %s795 = scalar_lea.vmem [#allocation2], 3
    %796 = vst.msk [vmem:[%s795] ss:$8 sm:$0x3] %vm752, %v771
    %797 = vst.msk [vmem:[%s795] ss:$8 sm:$0x0] %vm752, %v771
    %v800 = vcombine.low %v707, %v708
    %v802 = vunpack.c.l.s4 1966171168
    %v803 = vunpack.c.0.s8 %v802
    %v804 = vlaneseq
    %v805 = vshrl.u32 %v804, 7
    %v806 = vsub.s32 %v803, %v805
    %v807 = vrot.slane %v800, %v806
    %v808 = vcombine.high %v807, %v807
    %v810 = vunpack.c.l.s4 1966171168
    %v811 = vunpack.c.0.s8 %v810
    %v812 = vlaneseq
    %v813 = vshrl.u32 %v812, 7
    %v814 = vsub.s32 %v811, %v813
    %v815 = vrot.slane %v808, %v814
    %v816 = vcombine.high %v815, %v815
    %s818 = scalar_lea.vmem [#allocation2], 4
    %819 = vst.msk [vmem:[%s818] ss:$8 sm:$0x3] %vm752, %v816
    %820 = vst.msk [vmem:[%s818] ss:$8 sm:$0x0] %vm752, %v816
    %v823 = vcombine.low %v721, %v722
    %v825 = vunpack.c.l.s4 1966171168
    %v826 = vunpack.c.0.s8 %v825
    %v827 = vlaneseq
    %v828 = vshrl.u32 %v827, 7
    %v829 = vsub.s32 %v826, %v828
    %v830 = vrot.slane %v823, %v829
    %v831 = vcombine.high %v830, %v830
    %v833 = vunpack.c.l.s4 1966171168
    %v834 = vunpack.c.0.s8 %v833
    %v835 = vlaneseq
    %v836 = vshrl.u32 %v835, 7
    %v837 = vsub.s32 %v834, %v836
    %v838 = vrot.slane %v831, %v837
    %v839 = vcombine.high %v838, %v838
    %s841 = scalar_lea.vmem [#allocation2], 5
    %842 = vst.msk [vmem:[%s841] ss:$8 sm:$0x3] %vm752, %v839
    %843 = vst.msk [vmem:[%s841] ss:$8 sm:$0x0] %vm752, %v839
    %s844 = scalar_lea.vmem [#allocation2], 6
    %845 = vst.msk [vmem:[%s844] ss:$8 sm:$0x3] %vm752, %v790
    %846 = vst.msk [vmem:[%s844] ss:$8 sm:$0x0] %vm752, %v790
    %s847 = scalar_lea.vmem [#allocation2], 7
    %848 = vst.msk [vmem:[%s847] ss:$8 sm:$0x3] %vm752, %v839
    %849 = vst.msk [vmem:[%s847] ss:$8 sm:$0x0] %vm752, %v839
    %v852 = vcombine.high %v731, %v732
    %v854 = vunpack.c.l.s4 1966171168
    %v855 = vunpack.c.0.s8 %v854
    %v856 = vlaneseq
    %v857 = vshrl.u32 %v856, 7
    %v858 = vsub.s32 %v855, %v857
    %v859 = vrot.slane %v852, %v858
    %v861 = vunpack.c.l.s4 1966171168
    %v862 = vunpack.c.0.s8 %v861
    %v863 = vlaneseq
    %v864 = vshrl.u32 %v863, 7
    %v865 = vsub.s32 %v862, %v864
    %v866 = vrot.slane %v859, %v865
    %s868 = scalar_lea.vmem [#allocation2], 16
    %869 = vst.msk [vmem:[%s868] ss:$8 sm:$0x3] %vm752, %v866
    %870 = vst.msk [vmem:[%s868] ss:$8 sm:$0x0] %vm752, %v866
    // Predicated region
    $region22: #{_cholesky_head_call.1} parent=1 // pred_check
      _
    $region23: #{_cholesky_head_call.1} parent=1 // pred_check_branch
      %872 = sbr.rel (0) target = $region25
    $region24: #{_cholesky_head_call.1} parent=1 // pred_region
      %s874 = ssub.s32 512, 512
      %875 = vsyncadd [#allocation3], %s874
      %s876 = sshll.u32 [#allocation2], 4
      %s877 = int_to_ptr.vmem [resolvable:$true] %s876
      %882 = dma.vmem_to_hbm [thread:$0]  %s877, 512, %s5, [#allocation3], 256, 256, 16
    $region25: #{_cholesky_head_call.1} parent=1 // pred_fallthru
      _
    // Predicated region
    $region26: #{_cholesky_head_call.1} parent=1 // pred_check
      _
    $region27: #{_cholesky_head_call.1} parent=1 // pred_check_branch
      %884 = sbr.rel (0) target = $region29
    $region28: #{_cholesky_head_call.1} parent=1 // pred_region
      %885 = dma.done [#allocation3], 512
    $region29: #{_cholesky_head_call.1} parent=1 // pred_fallthru
      _
    %886 = vsyncpa [#allocation3], 1

</llo_original>
